<compile_context>
chip_gen: v5e
topology: v5e:2x2
jax: 0.10.0
libtpu: 0.0.40
codegen_flags: <defaults>
</compile_context>

<pallas_src>
import functools

import jax
import jax.numpy as jnp
from jax.experimental import pallas as pl
from jax.experimental.pallas import tpu as pltpu


def _round_up(x: int, m: int) -> int:
    return (x + m - 1) // m * m


def _xw_kernel(x_ref, w_ref, o_ref, acc_ref):
    # (TM, TKF) @ (TKF, F_out_pad) accumulated over the K axis, bf16 out.
    k = pl.program_id(1)

    @pl.when(k == 0)
    def _init():
        acc_ref[...] = jnp.zeros_like(acc_ref)

    acc_ref[...] += jnp.dot(
        x_ref[...], w_ref[...], preferred_element_type=jnp.float32
    )

    @pl.when(k == pl.num_programs(1) - 1)
    def _finalize():
        o_ref[...] = acc_ref[...].astype(o_ref.dtype)


def _gcn_agg_kernel(d_m_ref, a_ref, h_ref, *rest, apply_w):
    if apply_w:
        w_ref, o_ref, acc_ref = rest
    else:
        o_ref, acc_ref = rest

    k = pl.program_id(1)

    @pl.when(k == 0)
    def _init():
        acc_ref[...] = jnp.zeros_like(acc_ref)

    # int8 A tile -> bf16 in-kernel (VPU cast hides under the tile DMA); the
    # column-side D^{-1/2} was already folded into h at the call boundary.
    a_bf16 = a_ref[...].astype(jnp.bfloat16)
    acc_ref[...] += jnp.dot(a_bf16, h_ref[...], preferred_element_type=jnp.float32)

    @pl.when(k == pl.num_programs(1) - 1)
    def _finalize():
        m = d_m_ref[...] * acc_ref[...]  # row-side D^{-1/2}, f32
        if apply_w:
            z = jnp.dot(
                m.astype(jnp.bfloat16), w_ref[...],
                preferred_element_type=jnp.float32,
            )
        else:
            z = m
        o_ref[...] = jnp.maximum(z, 0.0).astype(o_ref.dtype)


@functools.partial(jax.jit, static_argnames=("node_tile",))
def gcn_forward(x, edge_list, w, *, node_tile=1024):
    """x: [N, F_in] f32, edge_list: [2, E] int, w: [F_in, F_out] f32 -> [N, F_out] f32."""
    n, f_in = x.shape
    f_out = w.shape[1]

    # ----- tiling / padding sizes -----
    t = min(node_tile, _round_up(n, 128))
    n_pad = _round_up(n, t)
    f_in_pad = _round_up(f_in, 128)
    f_out_pad = _round_up(f_out, 128)
    n_blocks = n_pad // t

    src = edge_list[0].astype(jnp.int32)
    tgt = edge_list[1].astype(jnp.int32)

    # ----- A_hat: one int8 scatter pass directly into the padded buffer -----
    # (edge scatter dedups duplicates via .set; +1 on the diagonal is the I).
    diag = jnp.arange(n, dtype=jnp.int32)
    a_pad = (
        jnp.zeros((n_pad, n_pad), jnp.int8)
        .at[src, tgt].set(jnp.int8(1))
        .at[diag, diag].add(jnp.int8(1))
    )

    # ----- degrees from the dedup'd edge list (O(E log E), no N^2 reduction) --
    # deg[j] = #distinct sources with an edge into j  +  1 (self-loop from I).
    eid = src * n + tgt
    eid_sorted = jnp.sort(eid)
    is_first = jnp.concatenate(
        [jnp.ones((1,), jnp.bool_), eid_sorted[1:] != eid_sorted[:-1]]
    )
    deg = jnp.ones((n,), jnp.float32).at[eid_sorted % n].add(
        is_first.astype(jnp.float32)
    )
    d_inv_sqrt = jax.lax.rsqrt(deg)

    # Row-side D^{-1/2}: [N_pad, 1] broadcasts directly against (T, F) tiles.
    # Padded rows get 0 (their A/H rows are all-zero, any finite value works).
    d_col = jnp.zeros((n_pad, 1), jnp.float32).at[:n, 0].set(d_inv_sqrt)

    # Column-side D^{-1/2} folded into X once:  D A D X W == D A (D X) W.
    x_pad = jnp.zeros((n_pad, f_in_pad), jnp.bfloat16).at[:n, :f_in].set(
        (d_inv_sqrt[:, None] * x).astype(jnp.bfloat16)
    )
    w_pad = jnp.zeros((f_in_pad, f_out_pad), jnp.bfloat16).at[:f_in, :f_out].set(
        w.astype(jnp.bfloat16)
    )

    apply_w = f_in_pad <= f_out_pad

    if apply_w:
        h = x_pad
        f_h = f_in_pad
    else:
        # Project features first so the N^2-scaled matmul contracts F_out_pad.
        if f_in_pad <= 512:
            tk_f = f_in_pad
        elif f_in_pad % 512 == 0:
            tk_f = 512
        elif f_in_pad % 256 == 0:
            tk_f = 256
        else:
            tk_f = 128
        k_blocks = f_in_pad // tk_f
        h = pl.pallas_call(
            _xw_kernel,
            out_shape=jax.ShapeDtypeStruct((n_pad, f_out_pad), jnp.bfloat16),
            grid=(n_blocks, k_blocks),
            in_specs=[
                pl.BlockSpec((t, tk_f), lambda i, k: (i, k)),
                pl.BlockSpec((tk_f, f_out_pad), lambda i, k: (k, 0)),
            ],
            out_specs=pl.BlockSpec((t, f_out_pad), lambda i, k: (i, 0)),
            scratch_shapes=[pltpu.VMEM((t, f_out_pad), jnp.float32)],
            compiler_params=pltpu.CompilerParams(
                dimension_semantics=("parallel", "arbitrary"),
            ),
        )(x_pad, w_pad)
        f_h = f_out_pad

    in_specs = [
        pl.BlockSpec((t, 1), lambda m, k: (m, 0)),    # D^{-1/2} for output rows
        pl.BlockSpec((t, t), lambda m, k: (m, k)),    # A_hat tile (int8)
        pl.BlockSpec((t, f_h), lambda m, k: (k, 0)),  # feature tile (bf16)
    ]
    args = [d_col, a_pad, h]
    if apply_w:
        in_specs.append(pl.BlockSpec((f_in_pad, f_out_pad), lambda m, k: (0, 0)))
        args.append(w_pad)

    z_pad = pl.pallas_call(
        functools.partial(_gcn_agg_kernel, apply_w=apply_w),
        out_shape=jax.ShapeDtypeStruct((n_pad, f_out_pad), jnp.float32),
        grid=(n_blocks, n_blocks),
        in_specs=in_specs,
        out_specs=pl.BlockSpec((t, f_out_pad), lambda m, k: (m, 0)),
        scratch_shapes=[pltpu.VMEM((t, f_h), jnp.float32)],
        compiler_params=pltpu.CompilerParams(
            dimension_semantics=("parallel", "arbitrary"),
        ),
    )(*args)

    return z_pad[:n, :f_out]


def init_weight(key, input_size, output_size):
    # Stand-in for nn.init.kaiming_normal_ on an (in, out) tensor:
    # PyTorch fan_in for a 2-D tensor is size(1) = output_size, gain = sqrt(2).
    std = (2.0 / output_size) ** 0.5
    return std * jax.random.normal(key, (input_size, output_size), dtype=jnp.float32)


def gcn_reference(x, edge_list, w):
    n = x.shape[0]
    a = jnp.zeros((n, n), jnp.float32).at[edge_list[0], edge_list[1]].set(1.0)
    a_hat = a + jnp.eye(n, dtype=jnp.float32)
    d = jax.lax.rsqrt(jnp.sum(a_hat, axis=0))
    return jnp.maximum((d[:, None] * a_hat * d[None, :]) @ x @ w, 0.0)


if __name__ == "__main__":
    key = jax.random.PRNGKey(0)
    k_w, k_x, k_src, k_tgt, k_w2, k_x2 = jax.random.split(key, 6)

    num_nodes = 16
    num_edges = 40
    edge_list = jnp.stack(
        [
            jax.random.randint(k_src, (num_edges,), 0, num_nodes),
            jax.random.randint(k_tgt, (num_edges,), 0, num_nodes),
        ],
        axis=0,
    )

    # --- case 1: F_in < F_out (W applied inside the aggregation kernel) ---
    f_in1, f_out1 = 8, 32
    w1 = init_weight(k_w, f_in1, f_out1)
    x1 = jax.random.normal(k_x, (num_nodes, f_in1), dtype=jnp.float32)
    z1 = gcn_forward(x1, edge_list, w1)
    jax.block_until_ready(z1)
    ref1 = gcn_reference(x1, edge_list, w1)
    assert z1.shape == (num_nodes, f_out1)
    err1 = jnp.linalg.norm(z1 - ref1) / (jnp.linalg.norm(ref1) + 1e-12)
    assert err1 < 1e-2, f"relative error too large: {err1}"

    # --- case 2: F_in > F_out (X @ W projected first, then aggregated) ---
    f_in2, f_out2 = 256, 32
    w2 = init_weight(k_w2, f_in2, f_out2)
    x2 = jax.random.normal(k_x2, (num_nodes, f_in2), dtype=jnp.float32)
    z2 = gcn_forward(x2, edge_list, w2)
    jax.block_until_ready(z2)
    ref2 = gcn_reference(x2, edge_list, w2)
    assert z2.shape == (num_nodes, f_out2)
    err2 = jnp.linalg.norm(z2 - ref2) / (jnp.linalg.norm(ref2) + 1e-12)
    assert err2 < 1e-2, f"relative error too large: {err2}"

    print("KERNEL_OK")
</pallas_src>

<mosaic_0001>
module attributes {stable_mosaic.version = 11 : i64} {
  func.func @_gcn_agg_kernel(%arg0: i32, %arg1: i32, %arg2: memref<128x1xf32, #tpu.memory_space<vmem>>, %arg3: memref<128x128xi8, #tpu.memory_space<vmem>>, %arg4: memref<128x128xbf16, #tpu.memory_space<vmem>>, %arg5: memref<128x128xbf16, #tpu.memory_space<vmem>>, %arg6: memref<128x128xf32, #tpu.memory_space<vmem>>, %arg7: memref<128x128xf32, #tpu.memory_space<vmem>>) attributes {dimension_semantics = [#tpu.dimension_semantics<parallel>, #tpu.dimension_semantics<arbitrary>], iteration_bounds = array<i64: 1, 1>, scalar_prefetch = 0 : i64, scratch_operands = 1 : i64, tpu.core_type = #tpu.core_type<tc>, window_params = [{transform_indices = @transform_0, window_bounds = array<i64: 128, 1>}, {transform_indices = @transform_1, window_bounds = array<i64: 128, 128>}, {transform_indices = @transform_2, window_bounds = array<i64: 128, 128>}, {pipeline_mode = #tpu.pipeline_mode<synchronous>, transform_indices = @transform_3, window_bounds = array<i64: 128, 128>}, {transform_indices = @transform_4, window_bounds = array<i64: 128, 128>}]} {
    %c0_i32 = arith.constant 0 : i32
    %0 = arith.cmpi eq, %arg1, %c0_i32 : i32
    %1 = arith.extui %0 : i1 to i32
    %c0_i32_0 = arith.constant 0 : i32
    %2 = arith.cmpi ne, %1, %c0_i32_0 : i32
    scf.if %2 {
      %cst_10 = arith.constant 0.000000e+00 : f32
      %13 = vector.broadcast %cst_10 : f32 to vector<128x128xf32>
      %c0_11 = arith.constant 0 : index
      %c0_12 = arith.constant 0 : index
      %14 = vector.load %arg7[%c0_11, %c0_12] : memref<128x128xf32, #tpu.memory_space<vmem>>, vector<128x128xf32>
      tpu.vector_store %arg7[%c0_11, %c0_12], %13 {strides = array<i32>} : memref<128x128xf32, #tpu.memory_space<vmem>>, vector<128x128xf32>,
    } else {
    }
    %c0 = arith.constant 0 : index
    %c0_1 = arith.constant 0 : index
    %3 = vector.load %arg3[%c0, %c0_1] : memref<128x128xi8, #tpu.memory_space<vmem>>, vector<128x128xi8>
    %4 = arith.sitofp %3 : vector<128x128xi8> to vector<128x128xbf16>
    %c0_2 = arith.constant 0 : index
    %c0_3 = arith.constant 0 : index
    %5 = vector.load %arg7[%c0_2, %c0_3] : memref<128x128xf32, #tpu.memory_space<vmem>>, vector<128x128xf32>
    %c0_4 = arith.constant 0 : index
    %c0_5 = arith.constant 0 : index
    %6 = vector.load %arg4[%c0_4, %c0_5] : memref<128x128xbf16, #tpu.memory_space<vmem>>, vector<128x128xbf16>
    %cst = arith.constant dense<0.000000e+00> : vector<128x128xf32>
    %7 = tpu.matmul %4, %6, %cst {dimension_numbers = #tpu.dot_dimension_numbers<[1], [0], [0], [1], [0, 0, 1, 1], [], []>} : vector<128x128xbf16>, vector<128x128xbf16>, vector<128x128xf32> -> vector<128x128xf32>
    %8 = arith.addf %5, %7 : vector<128x128xf32>
    %c0_6 = arith.constant 0 : index
    %c0_7 = arith.constant 0 : index
    %9 = vector.load %arg7[%c0_6, %c0_7] : memref<128x128xf32, #tpu.memory_space<vmem>>, vector<128x128xf32>
    tpu.vector_store %arg7[%c0_6, %c0_7], %8 {strides = array<i32>} : memref<128x128xf32, #tpu.memory_space<vmem>>, vector<128x128xf32>,
    %c0_i32_8 = arith.constant 0 : i32
    %10 = arith.cmpi eq, %arg1, %c0_i32_8 : i32
    %11 = arith.extui %10 : i1 to i32
    %c0_i32_9 = arith.constant 0 : i32
    %12 = arith.cmpi ne, %11, %c0_i32_9 : i32
    scf.if %12 {
      %c0_10 = arith.constant 0 : index
      %c0_11 = arith.constant 0 : index
      %13 = vector.load %arg2[%c0_10, %c0_11] : memref<128x1xf32, #tpu.memory_space<vmem>>, vector<128x1xf32>
      %c0_12 = arith.constant 0 : index
      %c0_13 = arith.constant 0 : index
      %14 = vector.load %arg7[%c0_12, %c0_13] : memref<128x128xf32, #tpu.memory_space<vmem>>, vector<128x128xf32>
      %15 = vector.broadcast %13 : vector<128x1xf32> to vector<128x128xf32>
      %16 = arith.mulf %15, %14 : vector<128x128xf32>
      %17 = arith.truncf %16 : vector<128x128xf32> to vector<128x128xbf16>
      %c0_14 = arith.constant 0 : index
      %c0_15 = arith.constant 0 : index
      %18 = vector.load %arg5[%c0_14, %c0_15] : memref<128x128xbf16, #tpu.memory_space<vmem>>, vector<128x128xbf16>
      %cst_16 = arith.constant dense<0.000000e+00> : vector<128x128xf32>
      %19 = tpu.matmul %17, %18, %cst_16 {dimension_numbers = #tpu.dot_dimension_numbers<[1], [0], [0], [1], [0, 0, 1, 1], [], []>} : vector<128x128xbf16>, vector<128x128xbf16>, vector<128x128xf32> -> vector<128x128xf32>
      %cst_17 = arith.constant 0.000000e+00 : f32
      %20 = vector.broadcast %cst_17 : f32 to vector<128x128xf32>
      %21 = arith.maximumf %19, %20 : vector<128x128xf32>
      %c0_18 = arith.constant 0 : index
      %c0_19 = arith.constant 0 : index
      %22 = vector.load %arg6[%c0_18, %c0_19] : memref<128x128xf32, #tpu.memory_space<vmem>>, vector<128x128xf32>
      tpu.vector_store %arg6[%c0_18, %c0_19], %21 {strides = array<i32>} : memref<128x128xf32, #tpu.memory_space<vmem>>, vector<128x128xf32>,
    } else {
    }
    return
  }
  func.func @transform_0(%arg0: i32, %arg1: i32) -> (i32, i32) {
    %c0_i32 = arith.constant 0 : i32
    %c0_i32_0 = arith.constant 0 : i32
    return %arg0, %c0_i32 : i32, i32
  }
  func.func @transform_1(%arg0: i32, %arg1: i32) -> (i32, i32) {
    %c0_i32 = arith.constant 0 : i32
    return %arg0, %arg1 : i32, i32
  }
  func.func @transform_2(%arg0: i32, %arg1: i32) -> (i32, i32) {
    %c0_i32 = arith.constant 0 : i32
    %c0_i32_0 = arith.constant 0 : i32
    return %arg1, %c0_i32 : i32, i32
  }
  func.func @transform_3(%arg0: i32, %arg1: i32) -> (i32, i32) {
    %c0_i32 = arith.constant 0 : i32
    %c0_i32_0 = arith.constant 0 : i32
    %c0_i32_1 = arith.constant 0 : i32
    return %c0_i32, %c0_i32_0 : i32, i32
  }
  func.func @transform_4(%arg0: i32, %arg1: i32) -> (i32, i32) {
    %c0_i32 = arith.constant 0 : i32
    %c0_i32_0 = arith.constant 0 : i32
    return %arg0, %c0_i32 : i32, i32
  }
}

</mosaic_0001>

<llo_original>
// kernel: gcn_forward.1
$region0: #{gcn_forward.1}
  #allocation0 [shape = 'u32[]', space=smem, size = 0x4, offset = 0x4, fixed_abs, tag = 'smem constant byte address 0x4 - core index']
  #allocation1 [shape = 'u32[72,128]{1,0:T(1,128)}', space=vmem, size = 0x9000, scoped, tag = 'internal scratch']
  #allocation2 [shape = 'f32[128,128]{1,0:T(8,128)}', space=vmem, size = 0x10000, scoped, tag = 'scratch operand']
  %s0 = inlined_call_operand.vmem [shape: f32[128,1], index: 0, kind: input, shape index: {}]
  %s1 = inlined_call_operand.vmem [shape: s8[128,128], index: 1, kind: input, shape index: {}]
  %s2 = inlined_call_operand.vmem [shape: bf16[128,128], index: 2, kind: input, shape index: {}]
  %s3 = inlined_call_operand.vmem [shape: bf16[128,128], index: 3, kind: input, shape index: {}]
  %s4 = inlined_call_operand.vmem [shape: f32[128,128], index: 4, kind: output, shape index: {}]
  %s5 = sld [smem:[#allocation0]]
  $region34: #{gcn_forward.1} parent=0
    _
  %s7 = ssub.s32 1, %s5
  %s8 = scalar_select 0, %s7, %s5
  // Predicated region
  $region2: #{gcn_forward.1} parent=0 // pred_check
    _
  $region3: #{gcn_forward.1} parent=0 // pred_check_branch
    %10 = sbr.rel (0) target = $region5
  $region4: #{gcn_forward.1} parent=0 // pred_region
    _
  $region5: #{gcn_forward.1} parent=0 // pred_fallthru
    _
  // Predicated region
  $region6: #{gcn_forward.1} parent=0 // pred_check
    _
  $region7: #{gcn_forward.1} parent=0 // pred_check_branch
    %12 = sbr.rel (0) target = $region9
  $region8: #{gcn_forward.1} parent=0 // pred_region
    _
  $region9: #{gcn_forward.1} parent=0 // pred_fallthru
    _
  // Predicated region
  $region10: #{gcn_forward.1} parent=0 // pred_check
    _
  $region11: #{gcn_forward.1} parent=0 // pred_check_branch
    %14 = sbr.rel (0) target = $region13
  $region12: #{gcn_forward.1} parent=0 // pred_region
    _
  $region13: #{gcn_forward.1} parent=0 // pred_fallthru
    _
  // Predicated region
  $region14: #{gcn_forward.1} parent=0 // pred_check
    _
  $region15: #{gcn_forward.1} parent=0 // pred_check_branch
    %16 = sbr.rel (0) target = $region17
  $region16: #{gcn_forward.1} parent=0 // pred_region
    _
  $region17: #{gcn_forward.1} parent=0 // pred_fallthru
    _
  %p17 = scmp.eq.s32.totalorder 0, 0
  // Predicated region
  $region18: #{gcn_forward.1} parent=0 // pred_check
    %p18 = pneg %p17
  $region19: #{gcn_forward.1} parent=0 // pred_check_branch
    %20 = sbr.rel (%p18) target = $region21
  $region20: #{gcn_forward.1} parent=0 // pred_region
    %21 = vst [vmem:[#allocation2] sm:$0xff] 0.0
    %22 = vst [vmem:[#allocation2 + $0x8] sm:$0xff] 0.0
    %23 = vst [vmem:[#allocation2 + $0x10] sm:$0xff] 0.0
    %24 = vst [vmem:[#allocation2 + $0x18] sm:$0xff] 0.0
    %25 = vst [vmem:[#allocation2 + $0x20] sm:$0xff] 0.0
    %26 = vst [vmem:[#allocation2 + $0x28] sm:$0xff] 0.0
    %27 = vst [vmem:[#allocation2 + $0x30] sm:$0xff] 0.0
    %28 = vst [vmem:[#allocation2 + $0x38] sm:$0xff] 0.0
    %29 = vst [vmem:[#allocation2 + $0x40] sm:$0xff] 0.0
    %30 = vst [vmem:[#allocation2 + $0x48] sm:$0xff] 0.0
    %31 = vst [vmem:[#allocation2 + $0x50] sm:$0xff] 0.0
    %32 = vst [vmem:[#allocation2 + $0x58] sm:$0xff] 0.0
    %33 = vst [vmem:[#allocation2 + $0x60] sm:$0xff] 0.0
    %34 = vst [vmem:[#allocation2 + $0x68] sm:$0xff] 0.0
    %35 = vst [vmem:[#allocation2 + $0x70] sm:$0xff] 0.0
    %36 = vst [vmem:[#allocation2 + $0x78] sm:$0xff] 0.0
  $region21: #{gcn_forward.1} parent=0 // pred_fallthru
    _
  %v37 = vld [vmem:[%s1] sm:$0x3]
  %v38 = vld [vmem:[%s1 + $0x2] sm:$0x3]
  %v39 = vld [vmem:[%s1 + $0x4] sm:$0x3]
  %v40 = vld [vmem:[%s1 + $0x6] sm:$0x3]
  %v41 = vld [vmem:[%s1 + $0x8] sm:$0x3]
  %v42 = vld [vmem:[%s1 + $0xa] sm:$0x3]
  %v43 = vld [vmem:[%s1 + $0xc] sm:$0x3]
  %v44 = vld [vmem:[%s1 + $0xe] sm:$0x3]
  %v45 = vld [vmem:[%s1 + $0x10] sm:$0x3]
  %v46 = vld [vmem:[%s1 + $0x12] sm:$0x3]
  %v47 = vld [vmem:[%s1 + $0x14] sm:$0x3]
  %v48 = vld [vmem:[%s1 + $0x16] sm:$0x3]
  %v49 = vld [vmem:[%s1 + $0x18] sm:$0x3]
  %v50 = vld [vmem:[%s1 + $0x1a] sm:$0x3]
  %v51 = vld [vmem:[%s1 + $0x1c] sm:$0x3]
  %v52 = vld [vmem:[%s1 + $0x1e] sm:$0x3]
  %v53 = vunpack.c.0.s8 %v37
  %v54 = vunpack.c.0.s8 %v38
  %v55 = vunpack.c.0.s8 %v39
  %v56 = vunpack.c.0.s8 %v40
  %v57 = vunpack.c.0.s8 %v41
  %v58 = vunpack.c.0.s8 %v42
  %v59 = vunpack.c.0.s8 %v43
  %v60 = vunpack.c.0.s8 %v44
  %v61 = vunpack.c.0.s8 %v45
  %v62 = vunpack.c.0.s8 %v46
  %v63 = vunpack.c.0.s8 %v47
  %v64 = vunpack.c.0.s8 %v48
  %v65 = vunpack.c.0.s8 %v49
  %v66 = vunpack.c.0.s8 %v50
  %v67 = vunpack.c.0.s8 %v51
  %v68 = vunpack.c.0.s8 %v52
  %v69 = vcvt.s32.f32 %v53
  %v70 = vcvt.s32.f32 %v54
  %v71 = vcvt.s32.f32 %v55
  %v72 = vcvt.s32.f32 %v56
  %v73 = vcvt.s32.f32 %v57
  %v74 = vcvt.s32.f32 %v58
  %v75 = vcvt.s32.f32 %v59
  %v76 = vcvt.s32.f32 %v60
  %v77 = vcvt.s32.f32 %v61
  %v78 = vcvt.s32.f32 %v62
  %v79 = vcvt.s32.f32 %v63
  %v80 = vcvt.s32.f32 %v64
  %v81 = vcvt.s32.f32 %v65
  %v82 = vcvt.s32.f32 %v66
  %v83 = vcvt.s32.f32 %v67
  %v84 = vcvt.s32.f32 %v68
  %v85 = vpack.c.bf16 %v70, %v69
  %v86 = vpack.c.bf16 %v72, %v71
  %v87 = vpack.c.bf16 %v74, %v73
  %v88 = vpack.c.bf16 %v76, %v75
  %v89 = vpack.c.bf16 %v78, %v77
  %v90 = vpack.c.bf16 %v80, %v79
  %v91 = vpack.c.bf16 %v82, %v81
  %v92 = vpack.c.bf16 %v84, %v83
  %v93 = vld [vmem:[#allocation2] sm:$0xff]
  %v94 = vld [vmem:[#allocation2 + $0x8] sm:$0xff]
  %v95 = vld [vmem:[#allocation2 + $0x10] sm:$0xff]
  %v96 = vld [vmem:[#allocation2 + $0x18] sm:$0xff]
  %v97 = vld [vmem:[#allocation2 + $0x20] sm:$0xff]
  %v98 = vld [vmem:[#allocation2 + $0x28] sm:$0xff]
  %v99 = vld [vmem:[#allocation2 + $0x30] sm:$0xff]
  %v100 = vld [vmem:[#allocation2 + $0x38] sm:$0xff]
  %v101 = vld [vmem:[#allocation2 + $0x40] sm:$0xff]
  %v102 = vld [vmem:[#allocation2 + $0x48] sm:$0xff]
  %v103 = vld [vmem:[#allocation2 + $0x50] sm:$0xff]
  %v104 = vld [vmem:[#allocation2 + $0x58] sm:$0xff]
  %v105 = vld [vmem:[#allocation2 + $0x60] sm:$0xff]
  %v106 = vld [vmem:[#allocation2 + $0x68] sm:$0xff]
  %v107 = vld [vmem:[#allocation2 + $0x70] sm:$0xff]
  %v108 = vld [vmem:[#allocation2 + $0x78] sm:$0xff]
  %v109 = vld [vmem:[%s2] sm:$0xf]
  %v110 = vld [vmem:[%s2 + $0x4] sm:$0xf]
  %v111 = vld [vmem:[%s2 + $0x8] sm:$0xf]
  %v112 = vld [vmem:[%s2 + $0xc] sm:$0xf]
  %v113 = vld [vmem:[%s2 + $0x10] sm:$0xf]
  %v114 = vld [vmem:[%s2 + $0x14] sm:$0xf]
  %v115 = vld [vmem:[%s2 + $0x18] sm:$0xf]
  %v116 = vld [vmem:[%s2 + $0x1c] sm:$0xf]
  %v117 = vld [vmem:[%s2 + $0x20] sm:$0xf]
  %v118 = vld [vmem:[%s2 + $0x24] sm:$0xf]
  %v119 = vld [vmem:[%s2 + $0x28] sm:$0xf]
  %v120 = vld [vmem:[%s2 + $0x2c] sm:$0xf]
  %v121 = vld [vmem:[%s2 + $0x30] sm:$0xf]
  %v122 = vld [vmem:[%s2 + $0x34] sm:$0xf]
  %v123 = vld [vmem:[%s2 + $0x38] sm:$0xf]
  %v124 = vld [vmem:[%s2 + $0x3c] sm:$0xf]
  %v141 = vunpack.c.l.b16 %v109
  %v142 = vunpack.c.l.b16 %v110
  %v143 = vunpack.c.l.b16 %v111
  %v144 = vunpack.c.l.b16 %v112
  %v145 = vunpack.c.l.b16 %v113
  %v146 = vunpack.c.l.b16 %v114
  %v147 = vunpack.c.l.b16 %v115
  %v148 = vunpack.c.l.b16 %v116
  %v149 = vunpack.c.l.b16 %v117
  %v150 = vunpack.c.l.b16 %v118
  %v151 = vunpack.c.l.b16 %v119
  %v152 = vunpack.c.l.b16 %v120
  %v153 = vunpack.c.l.b16 %v121
  %v154 = vunpack.c.l.b16 %v122
  %v155 = vunpack.c.l.b16 %v123
  %v156 = vunpack.c.l.b16 %v124
  %v157 = vpack.c.b16 %v142, %v141
  %v158 = vpack.c.b16 %v144, %v143
  %v159 = vpack.c.b16 %v146, %v145
  %v160 = vpack.c.b16 %v148, %v147
  %v161 = vpack.c.b16 %v150, %v149
  %v162 = vpack.c.b16 %v152, %v151
  %v163 = vpack.c.b16 %v154, %v153
  %v164 = vpack.c.b16 %v156, %v155
  %173 = vmatpush.bf16.msra.mxu0 %v164
  %174 = vmatpush.bf16.msra.mxu0 %v163
  %175 = vmatpush.bf16.msra.mxu0 %v162
  %176 = vmatpush.bf16.msra.mxu0 %v161
  %177 = vmatpush.bf16.msra.mxu0 %v160
  %178 = vmatpush.bf16.msra.mxu0 %v159
  %179 = vmatpush.bf16.msra.mxu0 %v158
  %180 = vmatpush.bf16.msra.mxu0 %v157
  %181 = vmatmul.bf16.gmra.mxu0 %v85
  %v182 = vpop.f32.mrf.mxu0
  %v183 = vadd.f32 0.0, %v182
  %v184 = vpop.f32.mrf.mxu0
  %v185 = vadd.f32 0.0, %v184
  %186 = vmatmul.bf16.gmra.mxu0 %v86
  %v187 = vpop.f32.mrf.mxu0
  %v188 = vadd.f32 0.0, %v187
  %v189 = vpop.f32.mrf.mxu0
  %v190 = vadd.f32 0.0, %v189
  %191 = vmatmul.bf16.gmra.mxu0 %v87
  %v192 = vpop.f32.mrf.mxu0
  %v193 = vadd.f32 0.0, %v192
  %v194 = vpop.f32.mrf.mxu0
  %v195 = vadd.f32 0.0, %v194
  %196 = vmatmul.bf16.gmra.mxu0 %v88
  %v197 = vpop.f32.mrf.mxu0
  %v198 = vadd.f32 0.0, %v197
  %v199 = vpop.f32.mrf.mxu0
  %v200 = vadd.f32 0.0, %v199
  %201 = vmatmul.bf16.gmra.mxu0 %v89
  %v202 = vpop.f32.mrf.mxu0
  %v203 = vadd.f32 0.0, %v202
  %v204 = vpop.f32.mrf.mxu0
  %v205 = vadd.f32 0.0, %v204
  %206 = vmatmul.bf16.gmra.mxu0 %v90
  %v207 = vpop.f32.mrf.mxu0
  %v208 = vadd.f32 0.0, %v207
  %v209 = vpop.f32.mrf.mxu0
  %v210 = vadd.f32 0.0, %v209
  %211 = vmatmul.bf16.gmra.mxu0 %v91
  %v212 = vpop.f32.mrf.mxu0
  %v213 = vadd.f32 0.0, %v212
  %v214 = vpop.f32.mrf.mxu0
  %v215 = vadd.f32 0.0, %v214
  %216 = vmatmul.bf16.gmra.mxu0 %v92
  %v217 = vpop.f32.mrf.mxu0
  %v218 = vadd.f32 0.0, %v217
  %v219 = vpop.f32.mrf.mxu0
  %v220 = vadd.f32 0.0, %v219
  %221 = vdwg.mxu0
  %v222 = vadd.f32 %v93, %v183
  %v223 = vadd.f32 %v94, %v185
  %v224 = vadd.f32 %v95, %v188
  %v225 = vadd.f32 %v96, %v190
  %v226 = vadd.f32 %v97, %v193
  %v227 = vadd.f32 %v98, %v195
  %v228 = vadd.f32 %v99, %v198
  %v229 = vadd.f32 %v100, %v200
  %v230 = vadd.f32 %v101, %v203
  %v231 = vadd.f32 %v102, %v205
  %v232 = vadd.f32 %v103, %v208
  %v233 = vadd.f32 %v104, %v210
  %v234 = vadd.f32 %v105, %v213
  %v235 = vadd.f32 %v106, %v215
  %v236 = vadd.f32 %v107, %v218
  %v237 = vadd.f32 %v108, %v220
  %238 = vst [vmem:[#allocation2] sm:$0xff] %v222
  %239 = vst [vmem:[#allocation2 + $0x8] sm:$0xff] %v223
  %240 = vst [vmem:[#allocation2 + $0x10] sm:$0xff] %v224
  %241 = vst [vmem:[#allocation2 + $0x18] sm:$0xff] %v225
  %242 = vst [vmem:[#allocation2 + $0x20] sm:$0xff] %v226
  %243 = vst [vmem:[#allocation2 + $0x28] sm:$0xff] %v227
  %244 = vst [vmem:[#allocation2 + $0x30] sm:$0xff] %v228
  %245 = vst [vmem:[#allocation2 + $0x38] sm:$0xff] %v229
  %246 = vst [vmem:[#allocation2 + $0x40] sm:$0xff] %v230
  %247 = vst [vmem:[#allocation2 + $0x48] sm:$0xff] %v231
  %248 = vst [vmem:[#allocation2 + $0x50] sm:$0xff] %v232
  %249 = vst [vmem:[#allocation2 + $0x58] sm:$0xff] %v233
  %250 = vst [vmem:[#allocation2 + $0x60] sm:$0xff] %v234
  %251 = vst [vmem:[#allocation2 + $0x68] sm:$0xff] %v235
  %252 = vst [vmem:[#allocation2 + $0x70] sm:$0xff] %v236
  %253 = vst [vmem:[#allocation2 + $0x78] sm:$0xff] %v237
  // Predicated region
  $region22: #{gcn_forward.1} parent=0 // pred_check
    %p254 = pneg %p17
  $region23: #{gcn_forward.1} parent=0 // pred_check_branch
    %256 = sbr.rel (%p254) target = $region25
  $region24: #{gcn_forward.1} parent=0 // pred_region
    %v257 = vld [vmem:[%s0] sm:$0xff]
    %v258 = vld [vmem:[%s0 + $0x8] sm:$0xff]
    %v259 = vld [vmem:[%s0 + $0x10] sm:$0xff]
    %v260 = vld [vmem:[%s0 + $0x18] sm:$0xff]
    %v261 = vld [vmem:[%s0 + $0x20] sm:$0xff]
    %v262 = vld [vmem:[%s0 + $0x28] sm:$0xff]
    %v263 = vld [vmem:[%s0 + $0x30] sm:$0xff]
    %v264 = vld [vmem:[%s0 + $0x38] sm:$0xff]
    %v265 = vld [vmem:[%s0 + $0x40] sm:$0xff]
    %v266 = vld [vmem:[%s0 + $0x48] sm:$0xff]
    %v267 = vld [vmem:[%s0 + $0x50] sm:$0xff]
    %v268 = vld [vmem:[%s0 + $0x58] sm:$0xff]
    %v269 = vld [vmem:[%s0 + $0x60] sm:$0xff]
    %v270 = vld [vmem:[%s0 + $0x68] sm:$0xff]
    %v271 = vld [vmem:[%s0 + $0x70] sm:$0xff]
    %v272 = vld [vmem:[%s0 + $0x78] sm:$0xff]
    %v273 = vld [vmem:[#allocation2] sm:$0xff]
    %v274 = vld [vmem:[#allocation2 + $0x8] sm:$0xff]
    %v275 = vld [vmem:[#allocation2 + $0x10] sm:$0xff]
    %v276 = vld [vmem:[#allocation2 + $0x18] sm:$0xff]
    %v277 = vld [vmem:[#allocation2 + $0x20] sm:$0xff]
    %v278 = vld [vmem:[#allocation2 + $0x28] sm:$0xff]
    %v279 = vld [vmem:[#allocation2 + $0x30] sm:$0xff]
    %v280 = vld [vmem:[#allocation2 + $0x38] sm:$0xff]
    %v281 = vld [vmem:[#allocation2 + $0x40] sm:$0xff]
    %v282 = vld [vmem:[#allocation2 + $0x48] sm:$0xff]
    %v283 = vld [vmem:[#allocation2 + $0x50] sm:$0xff]
    %v284 = vld [vmem:[#allocation2 + $0x58] sm:$0xff]
    %v285 = vld [vmem:[#allocation2 + $0x60] sm:$0xff]
    %v286 = vld [vmem:[#allocation2 + $0x68] sm:$0xff]
    %v287 = vld [vmem:[#allocation2 + $0x70] sm:$0xff]
    %v288 = vld [vmem:[#allocation2 + $0x78] sm:$0xff]
    %290 = vset.pattern.permute.xlu0 0
    %291 = vperm.xlu0 %290, %v257
    %v292 = vpop.permute.xlu0 %291
    %295 = vset.pattern.permute.xlu0 0
    %296 = vperm.xlu0 %295, %v258
    %v297 = vpop.permute.xlu0 %296
    %300 = vset.pattern.permute.xlu0 0
    %301 = vperm.xlu0 %300, %v259
    %v302 = vpop.permute.xlu0 %301
    %305 = vset.pattern.permute.xlu0 0
    %306 = vperm.xlu0 %305, %v260
    %v307 = vpop.permute.xlu0 %306
    %310 = vset.pattern.permute.xlu0 0
    %311 = vperm.xlu0 %310, %v261
    %v312 = vpop.permute.xlu0 %311
    %315 = vset.pattern.permute.xlu0 0
    %316 = vperm.xlu0 %315, %v262
    %v317 = vpop.permute.xlu0 %316
    %320 = vset.pattern.permute.xlu0 0
    %321 = vperm.xlu0 %320, %v263
    %v322 = vpop.permute.xlu0 %321
    %325 = vset.pattern.permute.xlu0 0
    %326 = vperm.xlu0 %325, %v264
    %v327 = vpop.permute.xlu0 %326
    %330 = vset.pattern.permute.xlu0 0
    %331 = vperm.xlu0 %330, %v265
    %v332 = vpop.permute.xlu0 %331
    %335 = vset.pattern.permute.xlu0 0
    %336 = vperm.xlu0 %335, %v266
    %v337 = vpop.permute.xlu0 %336
    %340 = vset.pattern.permute.xlu0 0
    %341 = vperm.xlu0 %340, %v267
    %v342 = vpop.permute.xlu0 %341
    %345 = vset.pattern.permute.xlu0 0
    %346 = vperm.xlu0 %345, %v268
    %v347 = vpop.permute.xlu0 %346
    %350 = vset.pattern.permute.xlu0 0
    %351 = vperm.xlu0 %350, %v269
    %v352 = vpop.permute.xlu0 %351
    %355 = vset.pattern.permute.xlu0 0
    %356 = vperm.xlu0 %355, %v270
    %v357 = vpop.permute.xlu0 %356
    %360 = vset.pattern.permute.xlu0 0
    %361 = vperm.xlu0 %360, %v271
    %v362 = vpop.permute.xlu0 %361
    %365 = vset.pattern.permute.xlu0 0
    %366 = vperm.xlu0 %365, %v272
    %v367 = vpop.permute.xlu0 %366
    %v369 = vmul.f32 %v292, %v273
    %v370 = vmul.f32 %v297, %v274
    %v371 = vmul.f32 %v302, %v275
    %v372 = vmul.f32 %v307, %v276
    %v373 = vmul.f32 %v312, %v277
    %v374 = vmul.f32 %v317, %v278
    %v375 = vmul.f32 %v322, %v279
    %v376 = vmul.f32 %v327, %v280
    %v377 = vmul.f32 %v332, %v281
    %v378 = vmul.f32 %v337, %v282
    %v379 = vmul.f32 %v342, %v283
    %v380 = vmul.f32 %v347, %v284
    %v381 = vmul.f32 %v352, %v285
    %v382 = vmul.f32 %v357, %v286
    %v383 = vmul.f32 %v362, %v287
    %v384 = vmul.f32 %v367, %v288
    %v385 = vpack.c.bf16 %v370, %v369
    %v386 = vpack.c.bf16 %v372, %v371
    %v387 = vpack.c.bf16 %v374, %v373
    %v388 = vpack.c.bf16 %v376, %v375
    %v389 = vpack.c.bf16 %v378, %v377
    %v390 = vpack.c.bf16 %v380, %v379
    %v391 = vpack.c.bf16 %v382, %v381
    %v392 = vpack.c.bf16 %v384, %v383
    %v393 = vld [vmem:[%s3] sm:$0xf]
    %v394 = vld [vmem:[%s3 + $0x4] sm:$0xf]
    %v395 = vld [vmem:[%s3 + $0x8] sm:$0xf]
    %v396 = vld [vmem:[%s3 + $0xc] sm:$0xf]
    %v397 = vld [vmem:[%s3 + $0x10] sm:$0xf]
    %v398 = vld [vmem:[%s3 + $0x14] sm:$0xf]
    %v399 = vld [vmem:[%s3 + $0x18] sm:$0xf]
    %v400 = vld [vmem:[%s3 + $0x1c] sm:$0xf]
    %v401 = vld [vmem:[%s3 + $0x20] sm:$0xf]
    %v402 = vld [vmem:[%s3 + $0x24] sm:$0xf]
    %v403 = vld [vmem:[%s3 + $0x28] sm:$0xf]
    %v404 = vld [vmem:[%s3 + $0x2c] sm:$0xf]
    %v405 = vld [vmem:[%s3 + $0x30] sm:$0xf]
    %v406 = vld [vmem:[%s3 + $0x34] sm:$0xf]
    %v407 = vld [vmem:[%s3 + $0x38] sm:$0xf]
    %v408 = vld [vmem:[%s3 + $0x3c] sm:$0xf]
    %v425 = vunpack.c.l.b16 %v393
    %v426 = vunpack.c.l.b16 %v394
    %v427 = vunpack.c.l.b16 %v395
    %v428 = vunpack.c.l.b16 %v396
    %v429 = vunpack.c.l.b16 %v397
    %v430 = vunpack.c.l.b16 %v398
    %v431 = vunpack.c.l.b16 %v399
    %v432 = vunpack.c.l.b16 %v400
    %v433 = vunpack.c.l.b16 %v401
    %v434 = vunpack.c.l.b16 %v402
    %v435 = vunpack.c.l.b16 %v403
    %v436 = vunpack.c.l.b16 %v404
    %v437 = vunpack.c.l.b16 %v405
    %v438 = vunpack.c.l.b16 %v406
    %v439 = vunpack.c.l.b16 %v407
    %v440 = vunpack.c.l.b16 %v408
    %v441 = vpack.c.b16 %v426, %v425
    %v442 = vpack.c.b16 %v428, %v427
    %v443 = vpack.c.b16 %v430, %v429
    %v444 = vpack.c.b16 %v432, %v431
    %v445 = vpack.c.b16 %v434, %v433
    %v446 = vpack.c.b16 %v436, %v435
    %v447 = vpack.c.b16 %v438, %v437
    %v448 = vpack.c.b16 %v440, %v439
    %457 = vmatpush.bf16.msra.mxu0 %v448
    %458 = vmatpush.bf16.msra.mxu0 %v447
    %459 = vmatpush.bf16.msra.mxu0 %v446
    %460 = vmatpush.bf16.msra.mxu0 %v445
    %461 = vmatpush.bf16.msra.mxu0 %v444
    %462 = vmatpush.bf16.msra.mxu0 %v443
    %463 = vmatpush.bf16.msra.mxu0 %v442
    %464 = vmatpush.bf16.msra.mxu0 %v441
    %465 = vmatmul.bf16.gmra.mxu0 %v385
    %v466 = vpop.f32.mrf.mxu0
    %v467 = vadd.f32 0.0, %v466
    %v468 = vpop.f32.mrf.mxu0
    %v469 = vadd.f32 0.0, %v468
    %470 = vmatmul.bf16.gmra.mxu0 %v386
    %v471 = vpop.f32.mrf.mxu0
    %v472 = vadd.f32 0.0, %v471
    %v473 = vpop.f32.mrf.mxu0
    %v474 = vadd.f32 0.0, %v473
    %475 = vmatmul.bf16.gmra.mxu0 %v387
    %v476 = vpop.f32.mrf.mxu0
    %v477 = vadd.f32 0.0, %v476
    %v478 = vpop.f32.mrf.mxu0
    %v479 = vadd.f32 0.0, %v478
    %480 = vmatmul.bf16.gmra.mxu0 %v388
    %v481 = vpop.f32.mrf.mxu0
    %v482 = vadd.f32 0.0, %v481
    %v483 = vpop.f32.mrf.mxu0
    %v484 = vadd.f32 0.0, %v483
    %485 = vmatmul.bf16.gmra.mxu0 %v389
    %v486 = vpop.f32.mrf.mxu0
    %v487 = vadd.f32 0.0, %v486
    %v488 = vpop.f32.mrf.mxu0
    %v489 = vadd.f32 0.0, %v488
    %490 = vmatmul.bf16.gmra.mxu0 %v390
    %v491 = vpop.f32.mrf.mxu0
    %v492 = vadd.f32 0.0, %v491
    %v493 = vpop.f32.mrf.mxu0
    %v494 = vadd.f32 0.0, %v493
    %495 = vmatmul.bf16.gmra.mxu0 %v391
    %v496 = vpop.f32.mrf.mxu0
    %v497 = vadd.f32 0.0, %v496
    %v498 = vpop.f32.mrf.mxu0
    %v499 = vadd.f32 0.0, %v498
    %500 = vmatmul.bf16.gmra.mxu0 %v392
    %v501 = vpop.f32.mrf.mxu0
    %v502 = vadd.f32 0.0, %v501
    %v503 = vpop.f32.mrf.mxu0
    %v504 = vadd.f32 0.0, %v503
    %505 = vdwg.mxu0
    %v506 = vmax.f32 %v467, 0.0
    %v507 = vmax.f32 %v469, 0.0
    %v508 = vmax.f32 %v472, 0.0
    %v509 = vmax.f32 %v474, 0.0
    %v510 = vmax.f32 %v477, 0.0
    %v511 = vmax.f32 %v479, 0.0
    %v512 = vmax.f32 %v482, 0.0
    %v513 = vmax.f32 %v484, 0.0
    %v514 = vmax.f32 %v487, 0.0
    %v515 = vmax.f32 %v489, 0.0
    %v516 = vmax.f32 %v492, 0.0
    %v517 = vmax.f32 %v494, 0.0
    %v518 = vmax.f32 %v497, 0.0
    %v519 = vmax.f32 %v499, 0.0
    %v520 = vmax.f32 %v502, 0.0
    %v521 = vmax.f32 %v504, 0.0
    %522 = vst [vmem:[%s4] sm:$0xff] %v506
    %523 = vst [vmem:[%s4 + $0x8] sm:$0xff] %v507
    %524 = vst [vmem:[%s4 + $0x10] sm:$0xff] %v508
    %525 = vst [vmem:[%s4 + $0x18] sm:$0xff] %v509
    %526 = vst [vmem:[%s4 + $0x20] sm:$0xff] %v510
    %527 = vst [vmem:[%s4 + $0x28] sm:$0xff] %v511
    %528 = vst [vmem:[%s4 + $0x30] sm:$0xff] %v512
    %529 = vst [vmem:[%s4 + $0x38] sm:$0xff] %v513
    %530 = vst [vmem:[%s4 + $0x40] sm:$0xff] %v514
    %531 = vst [vmem:[%s4 + $0x48] sm:$0xff] %v515
    %532 = vst [vmem:[%s4 + $0x50] sm:$0xff] %v516
    %533 = vst [vmem:[%s4 + $0x58] sm:$0xff] %v517
    %534 = vst [vmem:[%s4 + $0x60] sm:$0xff] %v518
    %535 = vst [vmem:[%s4 + $0x68] sm:$0xff] %v519
    %536 = vst [vmem:[%s4 + $0x70] sm:$0xff] %v520
    %537 = vst [vmem:[%s4 + $0x78] sm:$0xff] %v521
  $region25: #{gcn_forward.1} parent=0 // pred_fallthru
    _
  // Predicated region
  $region26: #{gcn_forward.1} parent=0 // pred_check
    _
  $region27: #{gcn_forward.1} parent=0 // pred_check_branch
    %539 = sbr.rel (0) target = $region29
  $region28: #{gcn_forward.1} parent=0 // pred_region
    _
  $region29: #{gcn_forward.1} parent=0 // pred_fallthru
    _
  // Predicated region
  $region30: #{gcn_forward.1} parent=0 // pred_check
    _
  $region31: #{gcn_forward.1} parent=0 // pred_check_branch
    %541 = sbr.rel (0) target = $region33
  $region32: #{gcn_forward.1} parent=0 // pred_region
    _
  $region33: #{gcn_forward.1} parent=0 // pred_fallthru
    _

</llo_original>
